<compile_context>
chip_gen: v6e
topology: v6e:2x2x1
jax: 0.10.0
libtpu: 0.0.40
codegen_flags: <defaults>
</compile_context>

<pallas_src>
import jax
import jax.numpy as jnp
from jax.experimental import pallas as pl
from jax.experimental.pallas import tpu as pltpu

MXU_DTYPE = jnp.bfloat16  # matmul operand dtype; accumulation stays f32


# --------------------------------------------------------------------------- kernels
def _resident_kernel(x_ref, w1_ref, b1_ref, w2_ref, b2_ref, o_ref):
    """Weights resident in VMEM; grid = (batch_tiles,)."""
    x = x_ref[...]                                                    # (tb, Hp) f32
    h = jnp.maximum(x, 0.0)                                           # ReLU (VPU, f32)
    h = jnp.dot(h.astype(w1_ref.dtype), w1_ref[...],
                preferred_element_type=jnp.float32) + b1_ref[...]     # MXU, f32 acc
    h = jnp.maximum(h, 0.0)
    h = jnp.dot(h.astype(w2_ref.dtype), w2_ref[...],
                preferred_element_type=jnp.float32) + b2_ref[...]
    o_ref[...] = x + h                                                # residual add


def _streamed_kernel(x_ref, w1_ref, b1_ref, w2_ref, b2_ref, o_ref, acc_ref):
    """Hidden-dim streamed; grid = (batch_tiles, hidden_tiles).

    Per hidden tile j:
      h_j  = relu(relu(x) @ W1[:, j]  + b1[j])          (N-tile of matmul 1)
      acc += h_j @ W2[j, :]                             (K-tile of matmul 2, f32 acc)
    Last j: out = x + acc + b2.
    """
    j = pl.program_id(1)

    @pl.when(j == 0)
    def _():
        acc_ref[...] = jnp.zeros_like(acc_ref)

    x = x_ref[...]                                                    # resident over j
    h = jnp.maximum(x, 0.0)
    h = jnp.dot(h.astype(w1_ref.dtype), w1_ref[...],
                preferred_element_type=jnp.float32) + b1_ref[...]
    h = jnp.maximum(h, 0.0)
    acc_ref[...] += jnp.dot(h.astype(w2_ref.dtype), w2_ref[...],
                            preferred_element_type=jnp.float32)

    @pl.when(j == pl.num_programs(1) - 1)
    def _():
        o_ref[...] = x + acc_ref[...] + b2_ref[...]


# --------------------------------------------------------------------------- helpers
def _round_up(n, m):
    return ((n + m - 1) // m) * m


def _vmem_budget_bytes():
    """Generation-aware VMEM budget: ~85% of physical per-core VMEM."""
    cap = 64 << 20  # conservative fallback = v7x per-TC VMEM
    try:
        info = pltpu.get_tpu_info()
        cap = int(getattr(info, "vmem_capacity_bytes", cap))
    except Exception:
        pass
    cap = min(max(cap, 32 << 20), 128 << 20)
    return int(cap * 0.85)


def _pick_tb(B, block_batch):
    """Batch tile: multiple of 256 when possible (full 256x256 MXU pass), else 8."""
    if block_batch is None:
        block_batch = 512
    tb = min(int(block_batch), B)
    if B >= 256 and tb >= 256:
        tb = (tb // 256) * 256
    elif B >= 8 and tb >= 8:
        tb = (tb // 8) * 8
    else:
        tb = B  # tiny batch: single full-extent tile (allowed by BlockSpec rule)
    return max(tb, 1)


def _pick_tk(H_pad, tb, budget, wbytes, block_hidden):
    """Hidden tile for the streamed path; must divide H_pad (avoids garbage in the
    K-accumulation of the second matmul)."""
    if block_hidden is not None:
        bh = max(128, (int(block_hidden) // 128) * 128)
        return bh if (bh <= H_pad and H_pad % bh == 0) else 128
    persistent = 5 * tb * H_pad * 4 + 2 * H_pad * 4 + (2 << 20)  # x + out (2x) + acc + biases
    for tk in (1024, 512, 256, 128):
        if tk > H_pad or H_pad % tk != 0:
            continue
        streamed = 2 * (2 * H_pad * tk * wbytes) + 2 * 2 * tk * 4  # double-buffered W blocks
        if persistent + streamed <= budget:
            return tk
    return 128


def prepare_params(w1, b1, w2, b2, *, mxu_dtype=MXU_DTYPE):
    """One-time prep (hoisted out of the hot path): transpose PyTorch (out,in) weights to
    (in,out), zero-pad H to a multiple of 128 (lane-dense tiles), cast weights to the MXU
    dtype.  Returns (w1_t, b1_2d, w2_t, b2_2d, H)."""
    H = w1.shape[0]
    H_pad = _round_up(max(H, 128), 128)
    pad = H_pad - H
    w1_t = jnp.pad(jnp.asarray(w1, jnp.float32).T, ((0, pad), (0, pad))).astype(mxu_dtype)
    w2_t = jnp.pad(jnp.asarray(w2, jnp.float32).T, ((0, pad), (0, pad))).astype(mxu_dtype)
    b1_p = jnp.pad(jnp.asarray(b1, jnp.float32), (0, pad)).reshape(1, H_pad)
    b2_p = jnp.pad(jnp.asarray(b2, jnp.float32), (0, pad)).reshape(1, H_pad)
    return (w1_t, b1_p, w2_t, b2_p, H)


# --------------------------------------------------------------------------- wrapper
def residual_block(x, params, *, block_batch=512, block_hidden=None):
    """x: (B, H) float32; params: output of prepare_params()."""
    w1_t, b1_2d, w2_t, b2_2d, H = params
    B, Hx = x.shape
    assert Hx == H, f"hidden dim mismatch: {Hx} vs {H}"
    H_pad = w1_t.shape[0]
    x_p = jnp.pad(x, ((0, 0), (0, H_pad - H))) if H_pad != H else x

    budget = _vmem_budget_bytes()
    wbytes = jnp.dtype(w1_t.dtype).itemsize
    weight_bytes = 2 * H_pad * H_pad * wbytes
    bias_bytes = 2 * H_pad * 4

    tb = _pick_tb(B, block_batch)
    nb = pl.cdiv(B, tb)
    io_bytes = 2 * 2 * tb * H_pad * 4  # double-buffered x + out tiles

    # Resident path only when the (single-buffered) weights + I/O fit the budget AND the
    # batch grid has >= 2 steps (otherwise the full weight DMA would serialize in front of
    # the only compute step — stream weight blocks instead so DMA overlaps MXU work).
    resident_fits = weight_bytes + io_bytes + bias_bytes + (2 << 20) <= budget
    use_resident = resident_fits and nb >= 2 and block_hidden is None

    weight_reads = 1 if use_resident else nb
    cost = pl.CostEstimate(
        flops=4 * B * H_pad * H_pad,
        transcendentals=0,
        bytes_accessed=2 * B * H_pad * 4 + weight_reads * weight_bytes + bias_bytes,
    )

    if use_resident:
        out = pl.pallas_call(
            _resident_kernel,
            out_shape=jax.ShapeDtypeStruct((B, H_pad), x.dtype),
            grid_spec=pltpu.PrefetchScalarGridSpec(
                num_scalar_prefetch=0,
                grid=(nb,),
                in_specs=[
                    pl.BlockSpec((tb, H_pad), lambda i: (i, 0)),            # x tile
                    # Constant index map + Buffered(1): weights/biases DMA'd once and held
                    # single-buffered.  (If the compiler ever double-buffers these, the
                    # streamed path below is the fallback since resident_fits leaves slack.)
                    pl.BlockSpec((H_pad, H_pad), lambda i: (0, 0),
                                 pipeline_mode=pl.Buffered(1)),              # W1^T resident
                    pl.BlockSpec((1, H_pad), lambda i: (0, 0),
                                 pipeline_mode=pl.Buffered(1)),              # b1 resident
                    pl.BlockSpec((H_pad, H_pad), lambda i: (0, 0),
                                 pipeline_mode=pl.Buffered(1)),              # W2^T resident
                    pl.BlockSpec((1, H_pad), lambda i: (0, 0),
                                 pipeline_mode=pl.Buffered(1)),              # b2 resident
                ],
                out_specs=pl.BlockSpec((tb, H_pad), lambda i: (i, 0)),
            ),
            compiler_params=pltpu.CompilerParams(
                dimension_semantics=("parallel",),
                vmem_limit_bytes=budget,
            ),
            cost_estimate=cost,
        )(x_p, w1_t, b1_2d, w2_t, b2_2d)
    else:
        tk = _pick_tk(H_pad, tb, budget, wbytes, block_hidden)
        nh = H_pad // tk
        out = pl.pallas_call(
            _streamed_kernel,
            out_shape=jax.ShapeDtypeStruct((B, H_pad), x.dtype),
            grid_spec=pltpu.PrefetchScalarGridSpec(
                num_scalar_prefetch=0,
                grid=(nb, nh),
                in_specs=[
                    pl.BlockSpec((tb, H_pad), lambda i, j: (i, 0)),   # x (resident over j)
                    pl.BlockSpec((H_pad, tk), lambda i, j: (0, j)),   # W1^T column block
                    pl.BlockSpec((1, tk), lambda i, j: (0, j)),       # b1 block
                    pl.BlockSpec((tk, H_pad), lambda i, j: (j, 0)),   # W2^T row block
                    pl.BlockSpec((1, H_pad), lambda i, j: (0, 0)),    # b2 (resident)
                ],
                out_specs=pl.BlockSpec((tb, H_pad), lambda i, j: (i, 0)),
                scratch_shapes=[pltpu.VMEM((tb, H_pad), jnp.float32)],  # f32 accumulator
            ),
            compiler_params=pltpu.CompilerParams(
                dimension_semantics=("parallel", "arbitrary"),
                vmem_limit_bytes=budget,
            ),
            cost_estimate=cost,
        )(x_p, w1_t, b1_2d, w2_t, b2_2d)

    return out[:, :H] if H_pad != H else out


# --------------------------------------------------------------------------- reference
def init_params(key, hidden_dim, zero_initialization=True):
    """Deterministic parameter init mirroring the PyTorch module's __init__."""
    k1, k2, k3, k4 = jax.random.split(key, 4)
    bound = 1.0 / jnp.sqrt(hidden_dim)  # default nn.Linear init range
    w1 = jax.random.uniform(k1, (hidden_dim, hidden_dim),
                            minval=-bound, maxval=bound, dtype=jnp.float32)
    b1 = jax.random.uniform(k2, (hidden_dim,),
                            minval=-bound, maxval=bound, dtype=jnp.float32)
    if zero_initialization:
        w2 = jax.random.uniform(k3, (hidden_dim, hidden_dim),
                                minval=-0.001, maxval=0.001, dtype=jnp.float32)
        b2 = jax.random.uniform(k4, (hidden_dim,),
                                minval=-0.001, maxval=0.001, dtype=jnp.float32)
    else:
        w2 = jax.random.uniform(k3, (hidden_dim, hidden_dim),
                                minval=-bound, maxval=bound, dtype=jnp.float32)
        b2 = jax.random.uniform(k4, (hidden_dim,),
                                minval=-bound, maxval=bound, dtype=jnp.float32)
    return w1, b1, w2, b2


def residual_block_ref_f32(x, w1, b1, w2, b2):
    """Pure-JAX f32 reference (exact PyTorch semantics)."""
    h = jnp.maximum(x, 0.0)
    h = h @ w1.T + b1
    h = jnp.maximum(h, 0.0)
    h = h @ w2.T + b2
    return x + h


def residual_block_ref_mxu(x, w1, b1, w2, b2, mxu_dtype=MXU_DTYPE):
    """Reference matching the kernel's bf16-operand / f32-accumulate matmuls."""
    h = jnp.maximum(x, 0.0)
    h = jnp.dot(h.astype(mxu_dtype), w1.T.astype(mxu_dtype),
                preferred_element_type=jnp.float32) + b1
    h = jnp.maximum(h, 0.0)
    h = jnp.dot(h.astype(mxu_dtype), w2.T.astype(mxu_dtype),
                preferred_element_type=jnp.float32) + b2
    return x + h


# --------------------------------------------------------------------------- tests
if __name__ == "__main__":
    # Test 1: small inference-style batch -> single batch tile -> streamed-weight path.
    B1, H1 = 8, 32
    kx, kp = jax.random.split(jax.random.PRNGKey(0))
    x1 = jax.random.normal(kx, (B1, H1), dtype=jnp.float32)
    w1, b1, w2, b2 = init_params(kp, H1)
    p1 = prepare_params(w1, b1, w2, b2)
    out1 = jax.block_until_ready(residual_block(x1, p1))
    assert out1.shape == (B1, H1) and out1.dtype == jnp.float32
    assert jnp.allclose(out1, residual_block_ref_mxu(x1, w1, b1, w2, b2),
                        atol=1e-3, rtol=1e-3), "test1: mismatch vs bf16-matched ref"
    assert jnp.allclose(out1, residual_block_ref_f32(x1, w1, b1, w2, b2),
                        atol=5e-2, rtol=5e-2), "test1: mismatch vs f32 ref"

    # Test 2: >= 2 batch tiles -> resident-weight path (weights held in VMEM).
    B2, H2 = 256, 32
    kx2, kp2 = jax.random.split(jax.random.PRNGKey(1))
    x2 = jax.random.normal(kx2, (B2, H2), dtype=jnp.float32)
    w1b, b1b, w2b, b2b = init_params(kp2, H2)
    p2 = prepare_params(w1b, b1b, w2b, b2b)
    out2 = jax.block_until_ready(residual_block(x2, p2, block_batch=128))
    assert jnp.allclose(out2, residual_block_ref_mxu(x2, w1b, b1b, w2b, b2b),
                        atol=1e-3, rtol=1e-3), "test2: mismatch vs bf16-matched ref"

    # Test 3: non-multiple-of-128 H with forced hidden-dim tiling (accumulator over
    # weight blocks) -> exercises padding + the streamed K-accumulation.
    B3, H3 = 16, 200
    kx3, kp3 = jax.random.split(jax.random.PRNGKey(2))
    x3 = jax.random.normal(kx3, (B3, H3), dtype=jnp.float32)
    w1c, b1c, w2c, b2c = init_params(kp3, H3)
    p3 = prepare_params(w1c, b1c, w2c, b2c)
    out3 = jax.block_until_ready(residual_block(x3, p3, block_hidden=128))
    assert out3.shape == (B3, H3)
    assert jnp.allclose(out3, residual_block_ref_mxu(x3, w1c, b1c, w2c, b2c),
                        atol=1e-3, rtol=1e-3), "test3: mismatch vs bf16-matched ref"

    print("KERNEL_OK")
</pallas_src>

<mosaic_0001>
module attributes {stable_mosaic.version = 11 : i64} {
  func.func @_streamed_kernel(%arg0: i32, %arg1: i32, %arg2: memref<8x128xf32, #tpu.memory_space<vmem>>, %arg3: memref<128x128xbf16, #tpu.memory_space<vmem>>, %arg4: memref<1x128xf32, #tpu.memory_space<vmem>>, %arg5: memref<128x128xbf16, #tpu.memory_space<vmem>>, %arg6: memref<1x128xf32, #tpu.memory_space<vmem>>, %arg7: memref<8x128xf32, #tpu.memory_space<vmem>>, %arg8: memref<8x128xf32, #tpu.memory_space<vmem>>) attributes {dimension_semantics = [#tpu.dimension_semantics<parallel>, #tpu.dimension_semantics<arbitrary>], iteration_bounds = array<i64: 1, 1>, scalar_prefetch = 0 : i64, scratch_operands = 1 : i64, tpu.core_type = #tpu.core_type<tc>, window_params = [{transform_indices = @transform_0, window_bounds = array<i64: 8, 128>}, {transform_indices = @transform_1, window_bounds = array<i64: 128, 128>}, {transform_indices = @transform_2, window_bounds = array<i64: 1, 128>}, {transform_indices = @transform_3, window_bounds = array<i64: 128, 128>}, {pipeline_mode = #tpu.pipeline_mode<synchronous>, transform_indices = @transform_4, window_bounds = array<i64: 1, 128>}, {transform_indices = @transform_5, window_bounds = array<i64: 8, 128>}]} {
    %c0_i32 = arith.constant 0 : i32
    %0 = arith.cmpi eq, %arg1, %c0_i32 : i32
    %1 = arith.extui %0 : i1 to i32
    %c0_i32_0 = arith.constant 0 : i32
    %2 = arith.cmpi ne, %1, %c0_i32_0 : i32
    scf.if %2 {
      %cst_17 = arith.constant 0.000000e+00 : f32
      %23 = vector.broadcast %cst_17 : f32 to vector<8x128xf32>
      %c0_18 = arith.constant 0 : index
      %c0_19 = arith.constant 0 : index
      %24 = vector.load %arg8[%c0_18, %c0_19] : memref<8x128xf32, #tpu.memory_space<vmem>>, vector<8x128xf32>
      tpu.vector_store %arg8[%c0_18, %c0_19], %23 {strides = array<i32>} : memref<8x128xf32, #tpu.memory_space<vmem>>, vector<8x128xf32>,
    } else {
    }
    %c0 = arith.constant 0 : index
    %c0_1 = arith.constant 0 : index
    %3 = vector.load %arg2[%c0, %c0_1] : memref<8x128xf32, #tpu.memory_space<vmem>>, vector<8x128xf32>
    %cst = arith.constant 0.000000e+00 : f32
    %4 = vector.broadcast %cst : f32 to vector<8x128xf32>
    %5 = arith.maximumf %3, %4 : vector<8x128xf32>
    %6 = arith.truncf %5 : vector<8x128xf32> to vector<8x128xbf16>
    %c0_2 = arith.constant 0 : index
    %c0_3 = arith.constant 0 : index
    %7 = vector.load %arg3[%c0_2, %c0_3] : memref<128x128xbf16, #tpu.memory_space<vmem>>, vector<128x128xbf16>
    %cst_4 = arith.constant dense<0.000000e+00> : vector<8x128xf32>
    %8 = tpu.matmul %6, %7, %cst_4 {dimension_numbers = #tpu.dot_dimension_numbers<[1], [0], [0], [1], [0, 0, 1, 1], [], []>} : vector<8x128xbf16>, vector<128x128xbf16>, vector<8x128xf32> -> vector<8x128xf32>
    %c0_5 = arith.constant 0 : index
    %c0_6 = arith.constant 0 : index
    %9 = vector.load %arg4[%c0_5, %c0_6] : memref<1x128xf32, #tpu.memory_space<vmem>>, vector<1x128xf32>
    %10 = vector.broadcast %9 : vector<1x128xf32> to vector<8x128xf32>
    %11 = arith.addf %8, %10 : vector<8x128xf32>
    %cst_7 = arith.constant 0.000000e+00 : f32
    %12 = vector.broadcast %cst_7 : f32 to vector<8x128xf32>
    %13 = arith.maximumf %11, %12 : vector<8x128xf32>
    %c0_8 = arith.constant 0 : index
    %c0_9 = arith.constant 0 : index
    %14 = vector.load %arg8[%c0_8, %c0_9] : memref<8x128xf32, #tpu.memory_space<vmem>>, vector<8x128xf32>
    %15 = arith.truncf %13 : vector<8x128xf32> to vector<8x128xbf16>
    %c0_10 = arith.constant 0 : index
    %c0_11 = arith.constant 0 : index
    %16 = vector.load %arg5[%c0_10, %c0_11] : memref<128x128xbf16, #tpu.memory_space<vmem>>, vector<128x128xbf16>
    %cst_12 = arith.constant dense<0.000000e+00> : vector<8x128xf32>
    %17 = tpu.matmul %15, %16, %cst_12 {dimension_numbers = #tpu.dot_dimension_numbers<[1], [0], [0], [1], [0, 0, 1, 1], [], []>} : vector<8x128xbf16>, vector<128x128xbf16>, vector<8x128xf32> -> vector<8x128xf32>
    %18 = arith.addf %14, %17 : vector<8x128xf32>
    %c0_13 = arith.constant 0 : index
    %c0_14 = arith.constant 0 : index
    %19 = vector.load %arg8[%c0_13, %c0_14] : memref<8x128xf32, #tpu.memory_space<vmem>>, vector<8x128xf32>
    tpu.vector_store %arg8[%c0_13, %c0_14], %18 {strides = array<i32>} : memref<8x128xf32, #tpu.memory_space<vmem>>, vector<8x128xf32>,
    %c0_i32_15 = arith.constant 0 : i32
    %20 = arith.cmpi eq, %arg1, %c0_i32_15 : i32
    %21 = arith.extui %20 : i1 to i32
    %c0_i32_16 = arith.constant 0 : i32
    %22 = arith.cmpi ne, %21, %c0_i32_16 : i32
    scf.if %22 {
      %c0_17 = arith.constant 0 : index
      %c0_18 = arith.constant 0 : index
      %23 = vector.load %arg8[%c0_17, %c0_18] : memref<8x128xf32, #tpu.memory_space<vmem>>, vector<8x128xf32>
      %24 = arith.addf %3, %23 : vector<8x128xf32>
      %c0_19 = arith.constant 0 : index
      %c0_20 = arith.constant 0 : index
      %25 = vector.load %arg6[%c0_19, %c0_20] : memref<1x128xf32, #tpu.memory_space<vmem>>, vector<1x128xf32>
      %26 = vector.broadcast %25 : vector<1x128xf32> to vector<8x128xf32>
      %27 = arith.addf %24, %26 : vector<8x128xf32>
      %c0_21 = arith.constant 0 : index
      %c0_22 = arith.constant 0 : index
      %28 = vector.load %arg7[%c0_21, %c0_22] : memref<8x128xf32, #tpu.memory_space<vmem>>, vector<8x128xf32>
      tpu.vector_store %arg7[%c0_21, %c0_22], %27 {strides = array<i32>} : memref<8x128xf32, #tpu.memory_space<vmem>>, vector<8x128xf32>,
    } else {
    }
    return
  }
  func.func @transform_0(%arg0: i32, %arg1: i32) -> (i32, i32) {
    %c0_i32 = arith.constant 0 : i32
    %c0_i32_0 = arith.constant 0 : i32
    return %arg0, %c0_i32 : i32, i32
  }
  func.func @transform_1(%arg0: i32, %arg1: i32) -> (i32, i32) {
    %c0_i32 = arith.constant 0 : i32
    %c0_i32_0 = arith.constant 0 : i32
    return %c0_i32, %arg1 : i32, i32
  }
  func.func @transform_2(%arg0: i32, %arg1: i32) -> (i32, i32) {
    %c0_i32 = arith.constant 0 : i32
    %c0_i32_0 = arith.constant 0 : i32
    return %c0_i32, %arg1 : i32, i32
  }
  func.func @transform_3(%arg0: i32, %arg1: i32) -> (i32, i32) {
    %c0_i32 = arith.constant 0 : i32
    %c0_i32_0 = arith.constant 0 : i32
    return %arg1, %c0_i32 : i32, i32
  }
  func.func @transform_4(%arg0: i32, %arg1: i32) -> (i32, i32) {
    %c0_i32 = arith.constant 0 : i32
    %c0_i32_0 = arith.constant 0 : i32
    %c0_i32_1 = arith.constant 0 : i32
    return %c0_i32, %c0_i32_0 : i32, i32
  }
  func.func @transform_5(%arg0: i32, %arg1: i32) -> (i32, i32) {
    %c0_i32 = arith.constant 0 : i32
    %c0_i32_0 = arith.constant 0 : i32
    return %arg0, %c0_i32 : i32, i32
  }
}

</mosaic_0001>

<llo_original>
// kernel: tpu_custom_call.1
$region0: #{tpu_custom_call.1}
  #allocation0 [shape = 'u32[]', space=smem, size = 0x4, offset = 0x4, fixed_abs, tag = 'smem constant byte address 0x4 - core index']
  #allocation1 [shape = 'u32[144,128]{1,0:T(1,128)}', space=vmem, size = 0x12000, scoped, tag = 'internal scratch']
  #allocation2 [shape = 'f32[8,128]{1,0:T(8,128)}', space=vmem, size = 0x1000, scoped, tag = 'scratch operand']
  %s0 = inlined_call_operand.hbm [shape: f32[8,128], index: 0, kind: input, shape index: {}]
  %s1 = inlined_call_operand.hbm [shape: bf16[128,128], index: 1, kind: input, shape index: {}]
  %s2 = inlined_call_operand.vmem [shape: f32[1,128], index: 2, kind: input, shape index: {}]
  %s3 = inlined_call_operand.hbm [shape: bf16[128,128], index: 3, kind: input, shape index: {}]
  %s4 = inlined_call_operand.vmem [shape: f32[1,128], index: 4, kind: input, shape index: {}]
  %s5 = inlined_call_operand.hbm [shape: f32[8,128], index: 5, kind: output, shape index: {}]
  %s6 = sld [smem:[#allocation0]]
  $region50: #{tpu_custom_call.1} parent=0
    _
  %s8 = ssub.s32 1, %s6
  %s9 = scalar_select 0, %s8, %s6
  $region1: #{tpu_custom_call.1} parent=0
    #allocation3 [shape = 'u8[4096]{0}', space=vmem, size = 0x1000, scoped, tag = 'input window, operand 0, single buffered']
    #allocation4 [shape = 's32[1]{0}', space=sflag, size = 0x4, scoped, tag = 'scoped memory for tpu_custom_call.1']
    #allocation5 [shape = 's32[1]{0}', space=sflag, size = 0x4, scoped, tag = 'scoped memory for tpu_custom_call.1']
    #allocation6 [shape = 'u8[32768]{0}', space=vmem, size = 0x8000, scoped, tag = 'input window, operand 1, single buffered']
    #allocation7 [shape = 's32[1]{0}', space=sflag, size = 0x4, scoped, tag = 'scoped memory for tpu_custom_call.1']
    #allocation8 [shape = 'u8[32768]{0}', space=vmem, size = 0x8000, scoped, tag = 'input window, operand 3, single buffered']
    #allocation9 [shape = 'u8[4096]{0}', space=vmem, size = 0x1000, scoped, tag = 'output window, operand 0, single buffered']
    %10 = vsyncpa [#allocation4], 0
    %11 = vsyncpa [#allocation7], 0
    %12 = vsyncpa [#allocation5], 0
    // Predicated region
    $region2: #{tpu_custom_call.1} parent=1 // pred_check
      _
    $region3: #{tpu_custom_call.1} parent=1 // pred_check_branch
      %14 = sbr.rel (0) target = $region5
    $region4: #{tpu_custom_call.1} parent=1 // pred_region
      %s16 = ssub.s32 128, 128
      %17 = vsyncadd [#allocation4], %s16
      %s19 = sshll.u32 [#allocation3], 4
      %s20 = int_to_ptr.vmem [resolvable:$true] %s19
      %22 = dma.hbm_to_vmem [thread:$0]  %s0, 128, %s20, [#allocation4]
    $region5: #{tpu_custom_call.1} parent=1 // pred_fallthru
      _
    // Predicated region
    $region6: #{tpu_custom_call.1} parent=1 // pred_check
      _
    $region7: #{tpu_custom_call.1} parent=1 // pred_check_branch
      %24 = sbr.rel (0) target = $region9
    $region8: #{tpu_custom_call.1} parent=1 // pred_region
      %s26 = ssub.s32 1024, 1024
      %27 = vsyncadd [#allocation7], %s26
      %s28 = sshll.u32 [#allocation6], 4
      %s29 = int_to_ptr.vmem [resolvable:$true] %s28
      %34 = dma.hbm_to_vmem [thread:$0]  %s1, 1024, %s29, [#allocation7], 64, 64, 4
    $region9: #{tpu_custom_call.1} parent=1 // pred_fallthru
      _
    // Predicated region
    $region10: #{tpu_custom_call.1} parent=1 // pred_check
      _
    $region11: #{tpu_custom_call.1} parent=1 // pred_check_branch
      %36 = sbr.rel (0) target = $region13
    $region12: #{tpu_custom_call.1} parent=1 // pred_region
      _
    $region13: #{tpu_custom_call.1} parent=1 // pred_fallthru
      _
    // Predicated region
    $region14: #{tpu_custom_call.1} parent=1 // pred_check
      _
    $region15: #{tpu_custom_call.1} parent=1 // pred_check_branch
      %38 = sbr.rel (0) target = $region17
    $region16: #{tpu_custom_call.1} parent=1 // pred_region
      %s40 = ssub.s32 1024, 1024
      %41 = vsyncadd [#allocation7], %s40
      %s42 = sshll.u32 [#allocation8], 4
      %s43 = int_to_ptr.vmem [resolvable:$true] %s42
      %48 = dma.hbm_to_vmem [thread:$0]  %s3, 1024, %s43, [#allocation7], 64, 64, 4
    $region17: #{tpu_custom_call.1} parent=1 // pred_fallthru
      _
    // Predicated region
    $region18: #{tpu_custom_call.1} parent=1 // pred_check
      _
    $region19: #{tpu_custom_call.1} parent=1 // pred_check_branch
      %50 = sbr.rel (0) target = $region21
    $region20: #{tpu_custom_call.1} parent=1 // pred_region
      _
    $region21: #{tpu_custom_call.1} parent=1 // pred_fallthru
      _
    // Predicated region
    $region22: #{tpu_custom_call.1} parent=1 // pred_check
      _
    $region23: #{tpu_custom_call.1} parent=1 // pred_check_branch
      %52 = sbr.rel (0) target = $region25
    $region24: #{tpu_custom_call.1} parent=1 // pred_region
      %53 = dma.done [#allocation4], 128
    $region25: #{tpu_custom_call.1} parent=1 // pred_fallthru
      _
    // Predicated region
    $region26: #{tpu_custom_call.1} parent=1 // pred_check
      _
    $region27: #{tpu_custom_call.1} parent=1 // pred_check_branch
      %55 = sbr.rel (0) target = $region29
    $region28: #{tpu_custom_call.1} parent=1 // pred_region
      %56 = dma.done [#allocation7], 1024
    $region29: #{tpu_custom_call.1} parent=1 // pred_fallthru
      _
    // Predicated region
    $region30: #{tpu_custom_call.1} parent=1 // pred_check
      _
    $region31: #{tpu_custom_call.1} parent=1 // pred_check_branch
      %58 = sbr.rel (0) target = $region33
    $region32: #{tpu_custom_call.1} parent=1 // pred_region
      %59 = dma.done [#allocation7], 1024
    $region33: #{tpu_custom_call.1} parent=1 // pred_fallthru
      _
    %p61 = scmp.eq.s32.totalorder 0, 0
    // Predicated region
    $region34: #{tpu_custom_call.1} parent=1 // pred_check
      %p62 = pneg %p61
    $region35: #{tpu_custom_call.1} parent=1 // pred_check_branch
      %64 = sbr.rel (%p62) target = $region37
    $region36: #{tpu_custom_call.1} parent=1 // pred_region
      %65 = vst [vmem:[#allocation2] sm:$0xff] 0.0
    $region37: #{tpu_custom_call.1} parent=1 // pred_fallthru
      _
    %v66 = vld [vmem:[#allocation3] sm:$0xff]
    %v67 = vmax.f32 %v66, 0.0
    %v68 = vpack.c.bf16 %v67, %v67
    %v69 = vld [vmem:[#allocation6] sm:$0xf]
    %v70 = vld [vmem:[#allocation6 + $0x4] sm:$0xf]
    %v71 = vld [vmem:[#allocation6 + $0x8] sm:$0xf]
    %v72 = vld [vmem:[#allocation6 + $0xc] sm:$0xf]
    %v73 = vld [vmem:[#allocation6 + $0x10] sm:$0xf]
    %v74 = vld [vmem:[#allocation6 + $0x14] sm:$0xf]
    %v75 = vld [vmem:[#allocation6 + $0x18] sm:$0xf]
    %v76 = vld [vmem:[#allocation6 + $0x1c] sm:$0xf]
    %v77 = vld [vmem:[#allocation6 + $0x20] sm:$0xf]
    %v78 = vld [vmem:[#allocation6 + $0x24] sm:$0xf]
    %v79 = vld [vmem:[#allocation6 + $0x28] sm:$0xf]
    %v80 = vld [vmem:[#allocation6 + $0x2c] sm:$0xf]
    %v81 = vld [vmem:[#allocation6 + $0x30] sm:$0xf]
    %v82 = vld [vmem:[#allocation6 + $0x34] sm:$0xf]
    %v83 = vld [vmem:[#allocation6 + $0x38] sm:$0xf]
    %v84 = vld [vmem:[#allocation6 + $0x3c] sm:$0xf]
    %v85 = vld [vmem:[%s2] sm:$0x1]
    %v87 = vlaneseq
    %v88 = vshrl.u32 %v87, 7
    %v89 = vsub.s32 0, %v88
    %v90 = vrot.slane %v85, %v89
    %v108 = vunpack.c.l.b16 %v69
    %v109 = vunpack.c.l.b16 %v70
    %v110 = vunpack.c.l.b16 %v71
    %v111 = vunpack.c.l.b16 %v72
    %v112 = vunpack.c.l.b16 %v73
    %v113 = vunpack.c.l.b16 %v74
    %v114 = vunpack.c.l.b16 %v75
    %v115 = vunpack.c.l.b16 %v76
    %v116 = vunpack.c.l.b16 %v77
    %v117 = vunpack.c.l.b16 %v78
    %v118 = vunpack.c.l.b16 %v79
    %v119 = vunpack.c.l.b16 %v80
    %v120 = vunpack.c.l.b16 %v81
    %v121 = vunpack.c.l.b16 %v82
    %v122 = vunpack.c.l.b16 %v83
    %v123 = vunpack.c.l.b16 %v84
    %v124 = vpack.c.b16 %v109, %v108
    %v125 = vpack.c.b16 %v111, %v110
    %v126 = vpack.c.b16 %v113, %v112
    %v127 = vpack.c.b16 %v115, %v114
    %v128 = vpack.c.b16 %v117, %v116
    %v129 = vpack.c.b16 %v119, %v118
    %v130 = vpack.c.b16 %v121, %v120
    %v131 = vpack.c.b16 %v123, %v122
    %140 = vmatprep.subr.bf16.mxu0 0
    %141 = vmatpush1.bf16.msra.mxu0 %v131
    %142 = vmatprep.subr.bf16.mxu0 0
    %143 = vmatpush1.bf16.msra.mxu0 %v130
    %144 = vmatprep.subr.bf16.mxu0 0
    %145 = vmatpush1.bf16.msra.mxu0 %v129
    %146 = vmatprep.subr.bf16.mxu0 0
    %147 = vmatpush1.bf16.msra.mxu0 %v128
    %148 = vmatprep.subr.bf16.mxu0 0
    %149 = vmatpush1.bf16.msra.mxu0 %v127
    %150 = vmatprep.subr.bf16.mxu0 0
    %151 = vmatpush1.bf16.msra.mxu0 %v126
    %152 = vmatprep.subr.bf16.mxu0 0
    %153 = vmatpush1.bf16.msra.mxu0 %v125
    %154 = vmatprep.subr.bf16.mxu0 0
    %155 = vmatpush1.bf16.msra.mxu0 %v124
    %156 = vmatprep.subr.bf16.mxu0 0
    %157 = vmatpush2.bf16.msra.mxu0 0
    %158 = vmatprep.subr.bf16.mxu0 0
    %159 = vmatpush2.bf16.msra.mxu0 0
    %160 = vmatprep.subr.bf16.mxu0 0
    %161 = vmatpush2.bf16.msra.mxu0 0
    %162 = vmatprep.subr.bf16.mxu0 0
    %163 = vmatpush2.bf16.msra.mxu0 0
    %164 = vmatprep.subr.bf16.mxu0 0
    %165 = vmatpush2.bf16.msra.mxu0 0
    %166 = vmatprep.subr.bf16.mxu0 0
    %167 = vmatpush2.bf16.msra.mxu0 0
    %168 = vmatprep.subr.bf16.mxu0 0
    %169 = vmatpush2.bf16.msra.mxu0 0
    %170 = vmatprep.subr.bf16.mxu0 0
    %171 = vmatpush2.bf16.msra.mxu0 0
    %172 = vmatprep.mubr.bf16.mxu0 0
    %173 = vmatmul.mubr.bf16.gmra.mxu0 %v68
    %v174 = vpop.f32.mrf.mxu0
    %v175 = vadd.f32 %v90, %v174
    %v176 = vpop.f32.mrf.mxu0
    %v177 = vpop.f32.mrf.mxu0
    %v178 = vpop.f32.mrf.mxu0
    %179 = vdwg.mxu0
    %v180 = vmax.f32 %v175, 0.0
    %v181 = vld [vmem:[#allocation2] sm:$0xff]
    %v182 = vpack.c.bf16 %v180, %v180
    %v183 = vld [vmem:[#allocation8] sm:$0xf]
    %v184 = vld [vmem:[#allocation8 + $0x4] sm:$0xf]
    %v185 = vld [vmem:[#allocation8 + $0x8] sm:$0xf]
    %v186 = vld [vmem:[#allocation8 + $0xc] sm:$0xf]
    %v187 = vld [vmem:[#allocation8 + $0x10] sm:$0xf]
    %v188 = vld [vmem:[#allocation8 + $0x14] sm:$0xf]
    %v189 = vld [vmem:[#allocation8 + $0x18] sm:$0xf]
    %v190 = vld [vmem:[#allocation8 + $0x1c] sm:$0xf]
    %v191 = vld [vmem:[#allocation8 + $0x20] sm:$0xf]
    %v192 = vld [vmem:[#allocation8 + $0x24] sm:$0xf]
    %v193 = vld [vmem:[#allocation8 + $0x28] sm:$0xf]
    %v194 = vld [vmem:[#allocation8 + $0x2c] sm:$0xf]
    %v195 = vld [vmem:[#allocation8 + $0x30] sm:$0xf]
    %v196 = vld [vmem:[#allocation8 + $0x34] sm:$0xf]
    %v197 = vld [vmem:[#allocation8 + $0x38] sm:$0xf]
    %v198 = vld [vmem:[#allocation8 + $0x3c] sm:$0xf]
    %v215 = vunpack.c.l.b16 %v183
    %v216 = vunpack.c.l.b16 %v184
    %v217 = vunpack.c.l.b16 %v185
    %v218 = vunpack.c.l.b16 %v186
    %v219 = vunpack.c.l.b16 %v187
    %v220 = vunpack.c.l.b16 %v188
    %v221 = vunpack.c.l.b16 %v189
    %v222 = vunpack.c.l.b16 %v190
    %v223 = vunpack.c.l.b16 %v191
    %v224 = vunpack.c.l.b16 %v192
    %v225 = vunpack.c.l.b16 %v193
    %v226 = vunpack.c.l.b16 %v194
    %v227 = vunpack.c.l.b16 %v195
    %v228 = vunpack.c.l.b16 %v196
    %v229 = vunpack.c.l.b16 %v197
    %v230 = vunpack.c.l.b16 %v198
    %v231 = vpack.c.b16 %v216, %v215
    %v232 = vpack.c.b16 %v218, %v217
    %v233 = vpack.c.b16 %v220, %v219
    %v234 = vpack.c.b16 %v222, %v221
    %v235 = vpack.c.b16 %v224, %v223
    %v236 = vpack.c.b16 %v226, %v225
    %v237 = vpack.c.b16 %v228, %v227
    %v238 = vpack.c.b16 %v230, %v229
    %247 = vmatprep.subr.bf16.mxu0 0
    %248 = vmatpush1.bf16.msra.mxu0 %v238
    %249 = vmatprep.subr.bf16.mxu0 0
    %250 = vmatpush1.bf16.msra.mxu0 %v237
    %251 = vmatprep.subr.bf16.mxu0 0
    %252 = vmatpush1.bf16.msra.mxu0 %v236
    %253 = vmatprep.subr.bf16.mxu0 0
    %254 = vmatpush1.bf16.msra.mxu0 %v235
    %255 = vmatprep.subr.bf16.mxu0 0
    %256 = vmatpush1.bf16.msra.mxu0 %v234
    %257 = vmatprep.subr.bf16.mxu0 0
    %258 = vmatpush1.bf16.msra.mxu0 %v233
    %259 = vmatprep.subr.bf16.mxu0 0
    %260 = vmatpush1.bf16.msra.mxu0 %v232
    %261 = vmatprep.subr.bf16.mxu0 0
    %262 = vmatpush1.bf16.msra.mxu0 %v231
    %263 = vmatprep.subr.bf16.mxu0 0
    %264 = vmatpush2.bf16.msra.mxu0 0
    %265 = vmatprep.subr.bf16.mxu0 0
    %266 = vmatpush2.bf16.msra.mxu0 0
    %267 = vmatprep.subr.bf16.mxu0 0
    %268 = vmatpush2.bf16.msra.mxu0 0
    %269 = vmatprep.subr.bf16.mxu0 0
    %270 = vmatpush2.bf16.msra.mxu0 0
    %271 = vmatprep.subr.bf16.mxu0 0
    %272 = vmatpush2.bf16.msra.mxu0 0
    %273 = vmatprep.subr.bf16.mxu0 0
    %274 = vmatpush2.bf16.msra.mxu0 0
    %275 = vmatprep.subr.bf16.mxu0 0
    %276 = vmatpush2.bf16.msra.mxu0 0
    %277 = vmatprep.subr.bf16.mxu0 0
    %278 = vmatpush2.bf16.msra.mxu0 0
    %279 = vmatprep.mubr.bf16.mxu0 0
    %280 = vmatmul.mubr.bf16.gmra.mxu0 %v182
    %v281 = vpop.f32.mrf.mxu0
    %v282 = vadd.f32 0.0, %v281
    %v283 = vpop.f32.mrf.mxu0
    %v284 = vpop.f32.mrf.mxu0
    %v285 = vpop.f32.mrf.mxu0
    %286 = vdwg.mxu0
    %v287 = vadd.f32 %v181, %v282
    %288 = vst [vmem:[#allocation2] sm:$0xff] %v287
    // Predicated region
    $region38: #{tpu_custom_call.1} parent=1 // pred_check
      %p289 = pneg %p61
    $region39: #{tpu_custom_call.1} parent=1 // pred_check_branch
      %291 = sbr.rel (%p289) target = $region41
    $region40: #{tpu_custom_call.1} parent=1 // pred_region
      %v292 = vld [vmem:[#allocation2] sm:$0xff]
      %v293 = vadd.f32 %v66, %v292
      %v294 = vld [vmem:[%s4] sm:$0x1]
      %v296 = vlaneseq
      %v297 = vshrl.u32 %v296, 7
      %v298 = vsub.s32 0, %v297
      %v299 = vrot.slane %v294, %v298
      %v301 = vadd.f32 %v293, %v299
      %302 = vst [vmem:[#allocation9] sm:$0xff] %v301
    $region41: #{tpu_custom_call.1} parent=1 // pred_fallthru
      _
    // Predicated region
    $region42: #{tpu_custom_call.1} parent=1 // pred_check
      _
    $region43: #{tpu_custom_call.1} parent=1 // pred_check_branch
      %304 = sbr.rel (0) target = $region45
    $region44: #{tpu_custom_call.1} parent=1 // pred_region
      %s306 = ssub.s32 128, 128
      %307 = vsyncadd [#allocation5], %s306
      %s309 = sshll.u32 [#allocation9], 4
      %s310 = int_to_ptr.vmem [resolvable:$true] %s309
      %312 = dma.vmem_to_hbm [thread:$0]  %s310, 128, %s5, [#allocation5]
    $region45: #{tpu_custom_call.1} parent=1 // pred_fallthru
      _
    // Predicated region
    $region46: #{tpu_custom_call.1} parent=1 // pred_check
      _
    $region47: #{tpu_custom_call.1} parent=1 // pred_check_branch
      %314 = sbr.rel (0) target = $region49
    $region48: #{tpu_custom_call.1} parent=1 // pred_region
      %315 = dma.done [#allocation5], 128
    $region49: #{tpu_custom_call.1} parent=1 // pred_fallthru
      _
    %316 = vsyncpa [#allocation4], 1
    %317 = vsyncpa [#allocation7], 1
    %318 = vsyncpa [#allocation5], 1

</llo_original>
